<compile_context>
chip_gen: v7x
topology: tpu7x:2x2x1
jax: 0.10.0
libtpu: 0.0.40
codegen_flags: <defaults>
</compile_context>

<pallas_src>
import functools

import jax
import jax.numpy as jnp
from jax.experimental import pallas as pl
from jax.experimental.pallas import tpu as pltpu

P_DROP = 0.3                       # nn.Dropout(0.3); module runs in training mode
KEEP_SCALE = 1.0 / (1.0 - P_DROP)
# PyTorch nn.GELU() defaults to exact erf; we use the tanh approximation
# (EUP-friendly). Small, documented numeric deviation from the reference.
GELU_APPROXIMATE = True


def _round_up(x, m):
    return ((x + m - 1) // m) * m


def _uniform01(seed_u32, row_off_u32, shape):
    """Stateless per-element uniform [0,1): murmur3-style fmix32 hash (portable)."""
    rows = jax.lax.broadcasted_iota(jnp.int32, shape, 0).astype(jnp.uint32)
    cols = jax.lax.broadcasted_iota(jnp.int32, shape, 1).astype(jnp.uint32)
    h = ((rows + row_off_u32) * jnp.uint32(0x9E3779B1)) \
        ^ (cols * jnp.uint32(0x85EBCA77)) \
        ^ (seed_u32 * jnp.uint32(0xC2B2AE3D))
    h = h ^ (h >> 16)
    h = h * jnp.uint32(0x85EBCA6B)
    h = h ^ (h >> 13)
    h = h * jnp.uint32(0xC2B2AE35)
    h = h ^ (h >> 16)
    # top 23 bits -> exactly representable float32 in [0, 1)
    return (h >> 9).astype(jnp.int32).astype(jnp.float32) * (1.0 / (1 << 23))


def feedforward_kernel(seed_ref, x_ref, w1_ref, b1_ref, w2_ref, b2_ref, o_ref,
                       *, tm, training, use_hw_prng):
    # Grid-position reads must stay at the top level of the body (NOT inside
    # pl.when branches) so the CPU/interpret fallback can substitute them.
    m_idx = pl.program_id(0)
    h_idx = pl.program_id(1)
    last_h = pl.num_programs(1) - 1
    row_base = m_idx * tm                       # global row offset of this tile

    # The f32 output block is resident across the hidden (reduction) axis:
    # zero it on the first hidden chunk and accumulate directly into it.
    @pl.when(h_idx == 0)
    def _init():
        o_ref[...] = jnp.zeros_like(o_ref)

    # ---- x @ W1[:, chunk] + b1[chunk]  (bf16 MXU inputs, f32 accumulation) ----
    h = jnp.dot(x_ref[...].astype(jnp.bfloat16), w1_ref[...],
                preferred_element_type=jnp.float32) + b1_ref[...]
    # ---- GELU (elementwise, so per-hidden-chunk application is exact) --------
    h = jax.nn.gelu(h, approximate=GELU_APPROXIMATE)
    # ---- second matmul chunk, accumulate over the hidden dimension -----------
    o_ref[...] += jnp.dot(h.astype(jnp.bfloat16), w2_ref[...],
                          preferred_element_type=jnp.float32)

    # ---- finalize on the last hidden chunk: bias, dropout, store -------------
    @pl.when(h_idx == last_h)
    def _finalize():
        y = o_ref[...] + b2_ref[...]
        if training:
            if use_hw_prng:
                # Cheap hardware PRNG, distinct stream per row tile.
                pltpu.prng_seed(seed_ref[0] + m_idx)
                bits = pltpu.bitcast(pltpu.prng_random_bits(y.shape), jnp.uint32)
                u = (bits >> 9).astype(jnp.int32).astype(jnp.float32) * (1.0 / (1 << 23))
            else:
                # Portable fallback (CPU / interpret harness).
                u = _uniform01(seed_ref[0].astype(jnp.uint32),
                               row_base.astype(jnp.uint32), y.shape)
            keep = (u >= P_DROP).astype(jnp.float32)
            y = y * keep * KEEP_SCALE
        o_ref[...] = y.astype(o_ref.dtype)


def _pick_vmem_limit():
    """Physical-VMEM-aware scoped limit (~54 MiB on v7x, ~112 MiB on v5e/v6e)."""
    cap = 64 << 20
    try:
        cap = int(pltpu.get_tpu_info().vmem_capacity_bytes)
    except Exception:
        pass
    return max(32 << 20, min(cap - (10 << 20), 112 << 20))


def _vmem_tile_bytes(tm, th, K, N, x_bytes):
    # Double-buffered tiles; weights streamed as bf16 chunks; no scratch.
    return (2 * tm * K * x_bytes        # x row tile
            + 2 * K * th * 2            # W1 chunk (bf16)
            + 2 * th * 4                # b1 chunk (f32)
            + 2 * th * N * 2            # W2 chunk (bf16)
            + 2 * N * 4                 # b2 (f32)
            + 2 * tm * N * 4)           # resident f32 output tile


def feedforward(x, w1, b1, w2, b2, seed, *, training=True, tm_max=None, th_max=2048):
    """x: (B, S, in_features) f32 -> (B, S, out_features) f32.

    Weights are stored transposed vs. PyTorch: w1 (K, 4N), w2 (4N, N), ideally
    already bf16 (init_params emits bf16) so no per-call weight casts happen.
    """
    B, S, K = x.shape
    H = w1.shape[1]               # 4 * out_features
    N = w2.shape[1]               # out_features
    M = B * S

    vmem_limit = _pick_vmem_limit()
    if tm_max is None:
        # Bigger row tiles where VMEM allows (v5e/v6e); 512 on v7x / unknown.
        tm_max = 1024 if vmem_limit >= (96 << 20) else 512

    x2d = x.reshape(M, K)                                   # bf16 cast happens in-kernel
    w1b = w1 if w1.dtype == jnp.bfloat16 else w1.astype(jnp.bfloat16)
    w2b = w2 if w2.dtype == jnp.bfloat16 else w2.astype(jnp.bfloat16)
    b1f = b1.reshape(1, H).astype(jnp.float32)
    b2f = b2.reshape(1, N).astype(jnp.float32)
    seed_arr = jnp.asarray([seed], dtype=jnp.int32)

    # Pad hidden dim to a multiple of 128 (zero-pad: gelu(0) * 0-rows adds 0).
    Hp = _round_up(H, 128)
    if Hp != H:
        w1b = jnp.pad(w1b, ((0, 0), (0, Hp - H)))
        b1f = jnp.pad(b1f, ((0, 0), (0, Hp - H)))
        w2b = jnp.pad(w2b, ((0, Hp - H), (0, 0)))

    # Row tile: up to tm_max, balanced across row tiles, multiple of 16.
    n_row_tiles = max(1, pl.cdiv(M, tm_max))
    tm = min(_round_up(pl.cdiv(M, n_row_tiles), 16), _round_up(M, 8))

    # Hidden chunk: largest 128-multiple divisor of Hp fitting the VMEM budget.
    x_bytes = x2d.dtype.itemsize
    budget = int(vmem_limit * 0.8)
    th_cands = [c for c in (2048, 1024, 512, 256, 128)
                if c <= max(th_max, 128) and Hp % c == 0] or [128]
    th = th_cands[-1]
    for c in th_cands:
        if _vmem_tile_bytes(tm, c, K, N, x_bytes) <= budget:
            th = c
            break
    while _vmem_tile_bytes(tm, th, K, N, x_bytes) > budget and tm > 64:
        tm = max(64, _round_up(tm // 2, 16))

    grid = (pl.cdiv(M, tm), Hp // th)

    cost = pl.CostEstimate(
        flops=2 * M * Hp * K + 2 * M * Hp * N,
        transcendentals=M * Hp,
        bytes_accessed=(M * K * x_bytes                              # x read once
                        + pl.cdiv(M, tm) * (K * Hp + Hp * N) * 2     # weight re-streams
                        + Hp * 4 + N * 4                             # biases
                        + M * N * 4),                                # output write
    )

    use_hw_prng = jax.default_backend() == "tpu"

    kernel = functools.partial(feedforward_kernel, tm=tm, training=training,
                               use_hw_prng=use_hw_prng)
    out = pl.pallas_call(
        kernel,
        out_shape=jax.ShapeDtypeStruct((M, N), jnp.float32),
        grid=grid,
        in_specs=[
            pl.BlockSpec(memory_space=pltpu.MemorySpace.SMEM),   # seed (scalar)
            pl.BlockSpec((tm, K), lambda i, h: (i, 0)),          # x row tile (resident over h)
            pl.BlockSpec((K, th), lambda i, h: (0, h)),          # W1 chunk (streamed)
            pl.BlockSpec((1, th), lambda i, h: (0, h)),          # b1 chunk
            pl.BlockSpec((th, N), lambda i, h: (h, 0)),          # W2 chunk (streamed)
            pl.BlockSpec((1, N), lambda i, h: (0, 0)),           # b2
        ],
        out_specs=pl.BlockSpec((tm, N), lambda i, h: (i, 0)),    # f32 accumulator-in-output
        compiler_params=pltpu.CompilerParams(
            dimension_semantics=("parallel", "arbitrary"),
            vmem_limit_bytes=vmem_limit,
        ),
        cost_estimate=cost,
    )(seed_arr, x2d, w1b, b1f, w2b, b2f)
    return out.reshape(B, S, N)


def init_params(key, in_features, out_features):
    """Deterministic init mimicking nn.Linear's U(-1/sqrt(fan_in), 1/sqrt(fan_in)).

    Weights are stored transposed relative to PyTorch (in, out) and kept in
    bf16 so the kernel wrapper never re-casts them per call.
    """
    hidden = 4 * out_features
    k1, k2, k3, k4 = jax.random.split(key, 4)
    bound1 = 1.0 / jnp.sqrt(in_features)
    bound2 = 1.0 / jnp.sqrt(hidden)
    w1 = jax.random.uniform(k1, (in_features, hidden), jnp.float32,
                            -bound1, bound1).astype(jnp.bfloat16)
    b1 = jax.random.uniform(k2, (1, hidden), jnp.float32, -bound1, bound1)
    w2 = jax.random.uniform(k3, (hidden, out_features), jnp.float32,
                            -bound2, bound2).astype(jnp.bfloat16)
    b2 = jax.random.uniform(k4, (1, out_features), jnp.float32, -bound2, bound2)
    return w1, b1, w2, b2


if __name__ == "__main__":
    in_features = 32
    out_features = 32
    B, S = 2, 8

    key = jax.random.PRNGKey(0)
    kx, kp = jax.random.split(key)
    x = jax.random.normal(kx, (B, S, in_features), dtype=jnp.float32)
    w1, b1, w2, b2 = init_params(kp, in_features, out_features)

    # TODO(synk): dropout mask uses JAX-side RNG (HW PRNG on TPU / hash off-TPU),
    # so it will never bit-match a PyTorch run; statistics (p=0.3, 1/0.7 scale) match.
    y = feedforward(x, w1, b1, w2, b2, seed=0)
    jax.block_until_ready(y)
    assert y.shape == (B, S, out_features)
    assert bool(jnp.all(jnp.isfinite(y)))
    print("KERNEL_OK")
</pallas_src>

<mosaic_0001>
module attributes {stable_mosaic.version = 11 : i64} {
  func.func @feedforward_kernel(%arg0: i32, %arg1: i32, %arg2: memref<1xi32, #tpu.memory_space<smem>>, %arg3: memref<16x32xf32, #tpu.memory_space<vmem>>, %arg4: memref<32x128xbf16, #tpu.memory_space<vmem>>, %arg5: memref<1x128xf32, #tpu.memory_space<vmem>>, %arg6: memref<128x32xbf16, #tpu.memory_space<vmem>>, %arg7: memref<1x32xf32, #tpu.memory_space<vmem>>, %arg8: memref<16x32xf32, #tpu.memory_space<vmem>>) attributes {dimension_semantics = [#tpu.dimension_semantics<parallel>, #tpu.dimension_semantics<arbitrary>], iteration_bounds = array<i64: 1, 1>, scalar_prefetch = 0 : i64, scratch_operands = 0 : i64, tpu.core_type = #tpu.core_type<tc>, window_params = [{transform_indices = @transform_0, window_bounds = array<i64: 1>}, {transform_indices = @transform_1, window_bounds = array<i64: 16, 32>}, {transform_indices = @transform_2, window_bounds = array<i64: 32, 128>}, {transform_indices = @transform_3, window_bounds = array<i64: 1, 128>}, {transform_indices = @transform_4, window_bounds = array<i64: 128, 32>}, {pipeline_mode = #tpu.pipeline_mode<synchronous>, transform_indices = @transform_5, window_bounds = array<i64: 1, 32>}, {transform_indices = @transform_6, window_bounds = array<i64: 16, 32>}]} {
    %c16_i32 = arith.constant 16 : i32
    %0 = arith.muli %arg0, %c16_i32 : i32
    %c0_i32 = arith.constant 0 : i32
    %1 = arith.cmpi eq, %arg1, %c0_i32 : i32
    %2 = arith.extui %1 : i1 to i32
    %c0_i32_0 = arith.constant 0 : i32
    %3 = arith.cmpi ne, %2, %c0_i32_0 : i32
    scf.if %3 {
      %cst_19 = arith.constant 0.000000e+00 : f32
      %33 = vector.broadcast %cst_19 : f32 to vector<16x32xf32>
      %c0_20 = arith.constant 0 : index
      %c0_21 = arith.constant 0 : index
      %34 = vector.load %arg8[%c0_20, %c0_21] : memref<16x32xf32, #tpu.memory_space<vmem>>, vector<16x32xf32>
      tpu.vector_store %arg8[%c0_20, %c0_21], %33 {strides = array<i32>} : memref<16x32xf32, #tpu.memory_space<vmem>>, vector<16x32xf32>,
    } else {
    }
    %c0 = arith.constant 0 : index
    %c0_1 = arith.constant 0 : index
    %4 = vector.load %arg3[%c0, %c0_1] : memref<16x32xf32, #tpu.memory_space<vmem>>, vector<16x32xf32>
    %5 = arith.truncf %4 : vector<16x32xf32> to vector<16x32xbf16>
    %c0_2 = arith.constant 0 : index
    %c0_3 = arith.constant 0 : index
    %6 = vector.load %arg4[%c0_2, %c0_3] : memref<32x128xbf16, #tpu.memory_space<vmem>>, vector<32x128xbf16>
    %cst = arith.constant dense<0.000000e+00> : vector<16x128xf32>
    %7 = tpu.matmul %5, %6, %cst {dimension_numbers = #tpu.dot_dimension_numbers<[1], [0], [0], [1], [0, 0, 1, 1], [], []>} : vector<16x32xbf16>, vector<32x128xbf16>, vector<16x128xf32> -> vector<16x128xf32>
    %c0_4 = arith.constant 0 : index
    %c0_5 = arith.constant 0 : index
    %8 = vector.load %arg5[%c0_4, %c0_5] : memref<1x128xf32, #tpu.memory_space<vmem>>, vector<1x128xf32>
    %9 = vector.broadcast %8 : vector<1x128xf32> to vector<16x128xf32>
    %10 = arith.addf %7, %9 : vector<16x128xf32>
    %11 = arith.mulf %10, %10 : vector<16x128xf32>
    %12 = arith.mulf %10, %11 : vector<16x128xf32>
    %cst_6 = arith.constant 4.471500e-02 : f32
    %13 = vector.broadcast %cst_6 : f32 to vector<16x128xf32>
    %14 = arith.mulf %13, %12 : vector<16x128xf32>
    %15 = arith.addf %10, %14 : vector<16x128xf32>
    %cst_7 = arith.constant 0.797884583 : f32
    %16 = vector.broadcast %cst_7 : f32 to vector<16x128xf32>
    %17 = arith.mulf %16, %15 : vector<16x128xf32>
    %18 = math.tanh %17 : vector<16x128xf32>
    %cst_8 = arith.constant 1.000000e+00 : f32
    %19 = vector.broadcast %cst_8 : f32 to vector<16x128xf32>
    %20 = arith.addf %19, %18 : vector<16x128xf32>
    %cst_9 = arith.constant 5.000000e-01 : f32
    %21 = vector.broadcast %cst_9 : f32 to vector<16x128xf32>
    %22 = arith.mulf %21, %20 : vector<16x128xf32>
    %23 = arith.mulf %10, %22 : vector<16x128xf32>
    %c0_10 = arith.constant 0 : index
    %c0_11 = arith.constant 0 : index
    %24 = vector.load %arg8[%c0_10, %c0_11] : memref<16x32xf32, #tpu.memory_space<vmem>>, vector<16x32xf32>
    %25 = arith.truncf %23 : vector<16x128xf32> to vector<16x128xbf16>
    %c0_12 = arith.constant 0 : index
    %c0_13 = arith.constant 0 : index
    %26 = vector.load %arg6[%c0_12, %c0_13] : memref<128x32xbf16, #tpu.memory_space<vmem>>, vector<128x32xbf16>
    %cst_14 = arith.constant dense<0.000000e+00> : vector<16x32xf32>
    %27 = tpu.matmul %25, %26, %cst_14 {dimension_numbers = #tpu.dot_dimension_numbers<[1], [0], [0], [1], [0, 0, 1, 1], [], []>} : vector<16x128xbf16>, vector<128x32xbf16>, vector<16x32xf32> -> vector<16x32xf32>
    %28 = arith.addf %24, %27 : vector<16x32xf32>
    %c0_15 = arith.constant 0 : index
    %c0_16 = arith.constant 0 : index
    %29 = vector.load %arg8[%c0_15, %c0_16] : memref<16x32xf32, #tpu.memory_space<vmem>>, vector<16x32xf32>
    tpu.vector_store %arg8[%c0_15, %c0_16], %28 {strides = array<i32>} : memref<16x32xf32, #tpu.memory_space<vmem>>, vector<16x32xf32>,
    %c0_i32_17 = arith.constant 0 : i32
    %30 = arith.cmpi eq, %arg1, %c0_i32_17 : i32
    %31 = arith.extui %30 : i1 to i32
    %c0_i32_18 = arith.constant 0 : i32
    %32 = arith.cmpi ne, %31, %c0_i32_18 : i32
    scf.if %32 {
      %c0_19 = arith.constant 0 : index
      %c0_20 = arith.constant 0 : index
      %33 = vector.load %arg8[%c0_19, %c0_20] : memref<16x32xf32, #tpu.memory_space<vmem>>, vector<16x32xf32>
      %c0_21 = arith.constant 0 : index
      %c0_22 = arith.constant 0 : index
      %34 = vector.load %arg7[%c0_21, %c0_22] : memref<1x32xf32, #tpu.memory_space<vmem>>, vector<1x32xf32>
      %35 = vector.broadcast %34 : vector<1x32xf32> to vector<16x32xf32>
      %36 = arith.addf %33, %35 : vector<16x32xf32>
      %c0_23 = arith.constant 0 : index
      %37 = memref.load %arg2[%c0_23] : memref<1xi32, #tpu.memory_space<smem>>
      %38 = tpu.iota {dimensions = array<i32: 0>} : vector<16x32xi32>
      %39 = tpu.iota {dimensions = array<i32: 1>} : vector<16x32xi32>
      %40 = vector.broadcast %0 : i32 to vector<16x32xi32>
      %41 = arith.addi %38, %40 : vector<16x32xi32>
      %c-1640531535_i32 = arith.constant -1640531535 : i32
      %42 = vector.broadcast %c-1640531535_i32 : i32 to vector<16x32xi32>
      %43 = arith.muli %41, %42 : vector<16x32xi32>
      %c-2048144777_i32 = arith.constant -2048144777 : i32
      %44 = vector.broadcast %c-2048144777_i32 : i32 to vector<16x32xi32>
      %45 = arith.muli %39, %44 : vector<16x32xi32>
      %46 = arith.xori %43, %45 : vector<16x32xi32>
      %c-1028477379_i32 = arith.constant -1028477379 : i32
      %47 = arith.muli %37, %c-1028477379_i32 : i32
      %48 = vector.broadcast %47 : i32 to vector<16x32xi32>
      %49 = arith.xori %46, %48 : vector<16x32xi32>
      %c16_i32_24 = arith.constant 16 : i32
      %50 = vector.broadcast %c16_i32_24 : i32 to vector<16x32xi32>
      %51 = arith.shrui %49, %50 : vector<16x32xi32>
      %52 = arith.xori %49, %51 : vector<16x32xi32>
      %c-2048144789_i32 = arith.constant -2048144789 : i32
      %53 = vector.broadcast %c-2048144789_i32 : i32 to vector<16x32xi32>
      %54 = arith.muli %52, %53 : vector<16x32xi32>
      %c13_i32 = arith.constant 13 : i32
      %55 = vector.broadcast %c13_i32 : i32 to vector<16x32xi32>
      %56 = arith.shrui %54, %55 : vector<16x32xi32>
      %57 = arith.xori %54, %56 : vector<16x32xi32>
      %c-1028477387_i32 = arith.constant -1028477387 : i32
      %58 = vector.broadcast %c-1028477387_i32 : i32 to vector<16x32xi32>
      %59 = arith.muli %57, %58 : vector<16x32xi32>
      %c16_i32_25 = arith.constant 16 : i32
      %60 = vector.broadcast %c16_i32_25 : i32 to vector<16x32xi32>
      %61 = arith.shrui %59, %60 : vector<16x32xi32>
      %62 = arith.xori %59, %61 : vector<16x32xi32>
      %c9_i32 = arith.constant 9 : i32
      %63 = vector.broadcast %c9_i32 : i32 to vector<16x32xi32>
      %64 = arith.shrui %62, %63 : vector<16x32xi32>
      %65 = arith.sitofp %64 : vector<16x32xi32> to vector<16x32xf32>
      %cst_26 = arith.constant 1.1920929E-7 : f32
      %66 = vector.broadcast %cst_26 : f32 to vector<16x32xf32>
      %67 = arith.mulf %65, %66 : vector<16x32xf32>
      %cst_27 = arith.constant 3.000000e-01 : f32
      %68 = vector.broadcast %cst_27 : f32 to vector<16x32xf32>
      %69 = arith.cmpf oge, %67, %68 : vector<16x32xf32>
      %70 = arith.extui %69 : vector<16x32xi1> to vector<16x32xi32>
      %71 = arith.sitofp %70 : vector<16x32xi32> to vector<16x32xf32>
      %72 = arith.mulf %36, %71 : vector<16x32xf32>
      %cst_28 = arith.constant 1.42857146 : f32
      %73 = vector.broadcast %cst_28 : f32 to vector<16x32xf32>
      %74 = arith.mulf %72, %73 : vector<16x32xf32>
      %c0_29 = arith.constant 0 : index
      %c0_30 = arith.constant 0 : index
      %75 = vector.load %arg8[%c0_29, %c0_30] : memref<16x32xf32, #tpu.memory_space<vmem>>, vector<16x32xf32>
      tpu.vector_store %arg8[%c0_29, %c0_30], %74 {strides = array<i32>} : memref<16x32xf32, #tpu.memory_space<vmem>>, vector<16x32xf32>,
    } else {
    }
    return
  }
  func.func @transform_0(%arg0: i32, %arg1: i32) -> i32 {
    %c0_i32 = arith.constant 0 : i32
    %c0_i32_0 = arith.constant 0 : i32
    return %c0_i32 : i32
  }
  func.func @transform_1(%arg0: i32, %arg1: i32) -> (i32, i32) {
    %c0_i32 = arith.constant 0 : i32
    %c0_i32_0 = arith.constant 0 : i32
    return %arg0, %c0_i32 : i32, i32
  }
  func.func @transform_2(%arg0: i32, %arg1: i32) -> (i32, i32) {
    %c0_i32 = arith.constant 0 : i32
    %c0_i32_0 = arith.constant 0 : i32
    return %c0_i32, %arg1 : i32, i32
  }
  func.func @transform_3(%arg0: i32, %arg1: i32) -> (i32, i32) {
    %c0_i32 = arith.constant 0 : i32
    %c0_i32_0 = arith.constant 0 : i32
    return %c0_i32, %arg1 : i32, i32
  }
  func.func @transform_4(%arg0: i32, %arg1: i32) -> (i32, i32) {
    %c0_i32 = arith.constant 0 : i32
    %c0_i32_0 = arith.constant 0 : i32
    return %arg1, %c0_i32 : i32, i32
  }
  func.func @transform_5(%arg0: i32, %arg1: i32) -> (i32, i32) {
    %c0_i32 = arith.constant 0 : i32
    %c0_i32_0 = arith.constant 0 : i32
    %c0_i32_1 = arith.constant 0 : i32
    return %c0_i32, %c0_i32_0 : i32, i32
  }
  func.func @transform_6(%arg0: i32, %arg1: i32) -> (i32, i32) {
    %c0_i32 = arith.constant 0 : i32
    %c0_i32_0 = arith.constant 0 : i32
    return %arg0, %c0_i32 : i32, i32
  }
}

</mosaic_0001>

<llo_original>
// kernel: tpu_custom_call.1
$region0: #{tpu_custom_call.1}
  #allocation0 [shape = 'u32[]', space=smem, size = 0x4, offset = 0x4, fixed_abs, tag = 'smem constant byte address 0x4 - core index']
  #allocation1 [shape = 'u32[144,128]{1,0:T(1,128)}', space=vmem, size = 0x12000, scoped, tag = 'internal scratch']
  #allocation2 [shape = 's32[1]{0:T(128)S(6)}', space=smem, size = 0x200, scoped, tag = 'scoped memory for tpu_custom_call.1']
  %s0 = inlined_call_operand.<no memory space> [shape: s32[1], index: 0, kind: input, shape index: {}]
  %s1 = inlined_call_operand.vmem [shape: f32[16,32], index: 1, kind: input, shape index: {}]
  %s2 = inlined_call_operand.vmem [shape: bf16[32,128], index: 2, kind: input, shape index: {}]
  %s3 = inlined_call_operand.vmem [shape: f32[1,128], index: 3, kind: input, shape index: {}]
  %s4 = inlined_call_operand.vmem [shape: bf16[128,32], index: 4, kind: input, shape index: {}]
  %s5 = inlined_call_operand.vmem [shape: f32[1,32], index: 5, kind: input, shape index: {}]
  %s6 = inlined_call_operand.hbm [shape: f32[16,32], index: 6, kind: output, shape index: {}]
  %s7 = sld [smem:[#allocation0]]
  $region42: #{tpu_custom_call.1} parent=0
    _
  %s9 = ssub.s32 1, %s7
  %s10 = scalar_select 0, %s9, %s7
  %11 = sst [smem:[#allocation2]] %s0
  $region1: #{tpu_custom_call.1} parent=0
    #allocation3 [shape = 'u8[8192]{0}', space=vmem, size = 0x2000, scoped, tag = 'output window, operand 0, single buffered']
    #allocation4 [shape = 's32[1]{0}', space=sflag, size = 0x4, scoped, tag = 'scoped memory for tpu_custom_call.1']
    %12 = vsyncpa [#allocation4], 0
    // Predicated region
    $region2: #{tpu_custom_call.1} parent=1 // pred_check
      _
    $region3: #{tpu_custom_call.1} parent=1 // pred_check_branch
      %14 = sbr.rel (0) target = $region5
    $region4: #{tpu_custom_call.1} parent=1 // pred_region
      _
    $region5: #{tpu_custom_call.1} parent=1 // pred_fallthru
      _
    // Predicated region
    $region6: #{tpu_custom_call.1} parent=1 // pred_check
      _
    $region7: #{tpu_custom_call.1} parent=1 // pred_check_branch
      %16 = sbr.rel (0) target = $region9
    $region8: #{tpu_custom_call.1} parent=1 // pred_region
      _
    $region9: #{tpu_custom_call.1} parent=1 // pred_fallthru
      _
    // Predicated region
    $region10: #{tpu_custom_call.1} parent=1 // pred_check
      _
    $region11: #{tpu_custom_call.1} parent=1 // pred_check_branch
      %18 = sbr.rel (0) target = $region13
    $region12: #{tpu_custom_call.1} parent=1 // pred_region
      _
    $region13: #{tpu_custom_call.1} parent=1 // pred_fallthru
      _
    // Predicated region
    $region14: #{tpu_custom_call.1} parent=1 // pred_check
      _
    $region15: #{tpu_custom_call.1} parent=1 // pred_check_branch
      %20 = sbr.rel (0) target = $region17
    $region16: #{tpu_custom_call.1} parent=1 // pred_region
      _
    $region17: #{tpu_custom_call.1} parent=1 // pred_fallthru
      _
    // Predicated region
    $region18: #{tpu_custom_call.1} parent=1 // pred_check
      _
    $region19: #{tpu_custom_call.1} parent=1 // pred_check_branch
      %22 = sbr.rel (0) target = $region21
    $region20: #{tpu_custom_call.1} parent=1 // pred_region
      _
    $region21: #{tpu_custom_call.1} parent=1 // pred_fallthru
      _
    // Predicated region
    $region22: #{tpu_custom_call.1} parent=1 // pred_check
      _
    $region23: #{tpu_custom_call.1} parent=1 // pred_check_branch
      %24 = sbr.rel (0) target = $region25
    $region24: #{tpu_custom_call.1} parent=1 // pred_region
      _
    $region25: #{tpu_custom_call.1} parent=1 // pred_fallthru
      _
    %s26 = smul.u32 0, 16
    %p27 = scmp.eq.s32.totalorder 0, 0
    // Predicated region
    $region26: #{tpu_custom_call.1} parent=1 // pred_check
      %p28 = pneg %p27
    $region27: #{tpu_custom_call.1} parent=1 // pred_check_branch
      %30 = sbr.rel (%p28) target = $region29
    $region28: #{tpu_custom_call.1} parent=1 // pred_region
      %vm31 = vcmask 261120
      %32 = vst.msk [vmem:[#allocation3] sm:$0xff] %vm31, 0.0
      %33 = vst.msk [vmem:[#allocation3 + $0x8] sm:$0xff] %vm31, 0.0
    $region29: #{tpu_custom_call.1} parent=1 // pred_fallthru
      _
    %v34 = vld [vmem:[%s1] sm:$0xff]
    %v35 = vld [vmem:[%s1 + $0x8] sm:$0xff]
    %v36 = vpack.c.bf16 %v35, %v34
    %v37 = vld [vmem:[%s2] sm:$0xf]
    %v38 = vld [vmem:[%s2 + $0x4] sm:$0xf]
    %v39 = vld [vmem:[%s2 + $0x8] sm:$0xf]
    %v40 = vld [vmem:[%s2 + $0xc] sm:$0xf]
    %v41 = vld [vmem:[%s3] sm:$0x1]
    %v43 = vlaneseq
    %v44 = vshrl.u32 %v43, 7
    %v45 = vsub.s32 0, %v44
    %v46 = vrot.slane %v41, %v45
    %v52 = vunpack.c.l.b16 %v37
    %v53 = vunpack.c.l.b16 %v38
    %v54 = vunpack.c.l.b16 %v39
    %v55 = vunpack.c.l.b16 %v40
    %v56 = vpack.c.b16 %v53, %v52
    %v57 = vpack.c.b16 %v55, %v54
    %vm60 = vcmask 261120
    %v62 = vsel %vm60, %v36, 0
    %64 = vmatprep.subr.bf16.mxu0 0
    %65 = vmatpush1.bf16.msra.mxu0 %v56
    %66 = vmatprep.subr.bf16.mxu0 0
    %67 = vmatpush1.bf16.msra.mxu0 %v57
    %68 = vmatprep.subr.bf16.mxu0 0
    %69 = vmatpush1.bf16.msra.mxu0 0
    %70 = vmatprep.subr.bf16.mxu0 0
    %71 = vmatpush1.bf16.msra.mxu0 0
    %72 = vmatprep.subr.bf16.mxu0 0
    %73 = vmatpush1.bf16.msra.mxu0 0
    %74 = vmatprep.subr.bf16.mxu0 0
    %75 = vmatpush1.bf16.msra.mxu0 0
    %76 = vmatprep.subr.bf16.mxu0 0
    %77 = vmatpush1.bf16.msra.mxu0 0
    %78 = vmatprep.subr.bf16.mxu0 0
    %79 = vmatpush1.bf16.msra.mxu0 0
    %80 = vmatprep.subr.bf16.mxu0 0
    %81 = vmatpush1.bf16.msra.mxu0 0
    %82 = vmatprep.subr.bf16.mxu0 0
    %83 = vmatpush1.bf16.msra.mxu0 0
    %84 = vmatprep.subr.bf16.mxu0 0
    %85 = vmatpush1.bf16.msra.mxu0 0
    %86 = vmatprep.subr.bf16.mxu0 0
    %87 = vmatpush1.bf16.msra.mxu0 0
    %88 = vmatprep.subr.bf16.mxu0 0
    %89 = vmatpush1.bf16.msra.mxu0 0
    %90 = vmatprep.subr.bf16.mxu0 0
    %91 = vmatpush1.bf16.msra.mxu0 0
    %92 = vmatprep.subr.bf16.mxu0 0
    %93 = vmatpush1.bf16.msra.mxu0 0
    %94 = vmatprep.subr.bf16.mxu0 0
    %95 = vmatpush1.bf16.msra.mxu0 0
    %96 = vmatprep.mubr.bf16.mxu0 0
    %97 = vmatmul.mubr.bf16.gmra.mrb[0].mxu0 %v62
    %v98 = vpop.f32.mrb[0].mxu0
    %v99 = vadd.f32 %v46, %v98
    %v100 = vpop.f32.mrb[0].mxu0
    %v101 = vpop.f32.mrb[0].mxu0
    %v102 = vadd.f32 %v46, %v101
    %v103 = vpop.f32.mrb[0].mxu0
    %104 = vdwg.mxu0
    %v105 = vmul.f32 %v99, %v99
    %v106 = vmul.f32 %v102, %v102
    %v107 = vmul.f32 %v99, %v105
    %v108 = vmul.f32 %v102, %v106
    %v109 = vmul.f32 %v107, 0.044715
    %v110 = vmul.f32 %v108, 0.044715
    %v111 = vadd.f32 %v99, %v109
    %v112 = vadd.f32 %v102, %v110
    %v113 = vmul.f32 %v111, 0.7978846
    %v114 = vmul.f32 %v112, 0.7978846
    %v115 = vtanh.pop %v113
    %v116 = vtanh.pop %v114
    %v117 = vadd.f32 %v115, 1.0
    %v118 = vadd.f32 %v116, 1.0
    %v119 = vmul.f32 %v117, 0.5
    %v120 = vmul.f32 %v118, 0.5
    %v121 = vmul.f32 %v99, %v119
    %v122 = vmul.f32 %v102, %v120
    %v123 = vld [vmem:[#allocation3] sm:$0xff]
    %v124 = vld [vmem:[#allocation3 + $0x8] sm:$0xff]
    %v125 = vpack.c.bf16 %v122, %v121
    %v126 = vld [vmem:[%s4] sm:$0xf]
    %v127 = vld [vmem:[%s4 + $0x4] sm:$0xf]
    %v128 = vld [vmem:[%s4 + $0x8] sm:$0xf]
    %v129 = vld [vmem:[%s4 + $0xc] sm:$0xf]
    %v130 = vld [vmem:[%s4 + $0x10] sm:$0xf]
    %v131 = vld [vmem:[%s4 + $0x14] sm:$0xf]
    %v132 = vld [vmem:[%s4 + $0x18] sm:$0xf]
    %v133 = vld [vmem:[%s4 + $0x1c] sm:$0xf]
    %v134 = vld [vmem:[%s4 + $0x20] sm:$0xf]
    %v135 = vld [vmem:[%s4 + $0x24] sm:$0xf]
    %v136 = vld [vmem:[%s4 + $0x28] sm:$0xf]
    %v137 = vld [vmem:[%s4 + $0x2c] sm:$0xf]
    %v138 = vld [vmem:[%s4 + $0x30] sm:$0xf]
    %v139 = vld [vmem:[%s4 + $0x34] sm:$0xf]
    %v140 = vld [vmem:[%s4 + $0x38] sm:$0xf]
    %v141 = vld [vmem:[%s4 + $0x3c] sm:$0xf]
    %v158 = vunpack.c.l.b16 %v126
    %v159 = vunpack.c.l.b16 %v127
    %v160 = vunpack.c.l.b16 %v128
    %v161 = vunpack.c.l.b16 %v129
    %v162 = vunpack.c.l.b16 %v130
    %v163 = vunpack.c.l.b16 %v131
    %v164 = vunpack.c.l.b16 %v132
    %v165 = vunpack.c.l.b16 %v133
    %v166 = vunpack.c.l.b16 %v134
    %v167 = vunpack.c.l.b16 %v135
    %v168 = vunpack.c.l.b16 %v136
    %v169 = vunpack.c.l.b16 %v137
    %v170 = vunpack.c.l.b16 %v138
    %v171 = vunpack.c.l.b16 %v139
    %v172 = vunpack.c.l.b16 %v140
    %v173 = vunpack.c.l.b16 %v141
    %v174 = vpack.c.b16 %v159, %v158
    %v175 = vpack.c.b16 %v161, %v160
    %v176 = vpack.c.b16 %v163, %v162
    %v177 = vpack.c.b16 %v165, %v164
    %v178 = vpack.c.b16 %v167, %v166
    %v179 = vpack.c.b16 %v169, %v168
    %v180 = vpack.c.b16 %v171, %v170
    %v181 = vpack.c.b16 %v173, %v172
    %190 = vmatprep.subr.bf16.mxu0 0
    %191 = vmatpush1.bf16.msra.mxu0 %v174
    %192 = vmatprep.subr.bf16.mxu0 0
    %193 = vmatpush1.bf16.msra.mxu0 %v175
    %194 = vmatprep.subr.bf16.mxu0 0
    %195 = vmatpush1.bf16.msra.mxu0 %v176
    %196 = vmatprep.subr.bf16.mxu0 0
    %197 = vmatpush1.bf16.msra.mxu0 %v177
    %198 = vmatprep.subr.bf16.mxu0 0
    %199 = vmatpush1.bf16.msra.mxu0 %v178
    %200 = vmatprep.subr.bf16.mxu0 0
    %201 = vmatpush1.bf16.msra.mxu0 %v179
    %202 = vmatprep.subr.bf16.mxu0 0
    %203 = vmatpush1.bf16.msra.mxu0 %v180
    %204 = vmatprep.subr.bf16.mxu0 0
    %205 = vmatpush1.bf16.msra.mxu0 %v181
    %206 = vmatprep.subr.bf16.mxu0 0
    %207 = vmatpush1.bf16.msra.mxu0 0
    %208 = vmatprep.subr.bf16.mxu0 0
    %209 = vmatpush1.bf16.msra.mxu0 0
    %210 = vmatprep.subr.bf16.mxu0 0
    %211 = vmatpush1.bf16.msra.mxu0 0
    %212 = vmatprep.subr.bf16.mxu0 0
    %213 = vmatpush1.bf16.msra.mxu0 0
    %214 = vmatprep.subr.bf16.mxu0 0
    %215 = vmatpush1.bf16.msra.mxu0 0
    %216 = vmatprep.subr.bf16.mxu0 0
    %217 = vmatpush1.bf16.msra.mxu0 0
    %218 = vmatprep.subr.bf16.mxu0 0
    %219 = vmatpush1.bf16.msra.mxu0 0
    %220 = vmatprep.subr.bf16.mxu0 0
    %221 = vmatpush1.bf16.msra.mxu0 0
    %222 = vmatprep.mubr.bf16.mxu0 0
    %223 = vmatmul.mubr.bf16.gmra.mrb[0].mxu0 %v125
    %v224 = vpop.f32.mrb[0].mxu0
    %v225 = vadd.f32 0.0, %v224
    %v226 = vpop.f32.mrb[0].mxu0
    %v227 = vpop.f32.mrb[0].mxu0
    %v228 = vadd.f32 0.0, %v227
    %v229 = vpop.f32.mrb[0].mxu0
    %230 = vdwg.mxu0
    %v231 = vadd.f32 %v123, %v225
    %v232 = vadd.f32 %v124, %v228
    %233 = vst.msk [vmem:[#allocation3] sm:$0xff] %vm60, %v231
    %234 = vst.msk [vmem:[#allocation3 + $0x8] sm:$0xff] %vm60, %v232
    // Predicated region
    $region30: #{tpu_custom_call.1} parent=1 // pred_check
      %p235 = pneg %p27
    $region31: #{tpu_custom_call.1} parent=1 // pred_check_branch
      %237 = sbr.rel (%p235) target = $region33
    $region32: #{tpu_custom_call.1} parent=1 // pred_region
      %v238 = vld [vmem:[#allocation3] sm:$0xff]
      %v239 = vld [vmem:[#allocation3 + $0x8] sm:$0xff]
      %v240 = vld [vmem:[%s5] sm:$0x1]
      %v242 = vlaneseq
      %v243 = vshrl.u32 %v242, 7
      %v244 = vsub.s32 0, %v243
      %v245 = vrot.slane %v240, %v244
      %v247 = vadd.f32 %v238, %v245
      %v248 = vadd.f32 %v239, %v245
      %s249 = sld [smem:[#allocation2]]
      %v250 = vlaneseq
      %v251 = vshrl.u32 %v250, 7
      %v252 = vadd.s32 %v251, 8
      %v253 = vlaneseq
      %v254 = vand.u32 %v253, 127
      %v255 = vstv %s26
      %v256 = vadd.s32 %v251, %v255
      %v257 = vadd.s32 %v252, %v255
      %v258 = vmul.u32 %v256, 2654435761
      %v259 = vmul.u32 %v257, 2654435761
      %v260 = vmul.u32 %v254, 2246822519
      %v261 = vxor.u32 %v258, %v260
      %v262 = vxor.u32 %v259, %v260
      %s263 = smul.u32 %s249, 3266489917
      %v264 = vstv %s263
      %v265 = vxor.u32 %v261, %v264
      %v266 = vxor.u32 %v262, %v264
      %v267 = vshrl.u32 %v265, 16
      %v268 = vshrl.u32 %v266, 16
      %v269 = vxor.u32 %v265, %v267
      %v270 = vxor.u32 %v266, %v268
      %v271 = vmul.u32 %v269, 2246822507
      %v272 = vmul.u32 %v270, 2246822507
      %v273 = vshrl.u32 %v271, 13
      %v274 = vshrl.u32 %v272, 13
      %v275 = vxor.u32 %v271, %v273
      %v276 = vxor.u32 %v272, %v274
      %v277 = vmul.u32 %v275, 3266489909
      %v278 = vmul.u32 %v276, 3266489909
      %v279 = vshrl.u32 %v277, 16
      %v280 = vshrl.u32 %v278, 16
      %v281 = vxor.u32 %v277, %v279
      %v282 = vxor.u32 %v278, %v280
      %v283 = vshrl.u32 %v281, 9
      %v284 = vshrl.u32 %v282, 9
      %v285 = vcvt.s32.f32 %v283
      %v286 = vcvt.s32.f32 %v284
      %v287 = vmul.f32 %v285, 1.1920929e-07
      %v288 = vmul.f32 %v286, 1.1920929e-07
      %vm289 = vcmp.ge.f32.partialorder %v287, 0.3
      %vm290 = vcmp.ge.f32.partialorder %v288, 0.3
      %v291 = vsel %vm289, 1, 0
      %v292 = vsel %vm290, 1, 0
      %v293 = vcvt.s32.f32 %v291
      %v294 = vcvt.s32.f32 %v292
      %v295 = vmul.f32 %v247, %v293
      %v296 = vmul.f32 %v248, %v294
      %v297 = vmul.f32 %v295, 1.4285715
      %v298 = vmul.f32 %v296, 1.4285715
      %299 = vst.msk [vmem:[#allocation3] sm:$0xff] %vm60, %v297
      %300 = vst.msk [vmem:[#allocation3 + $0x8] sm:$0xff] %vm60, %v298
    $region33: #{tpu_custom_call.1} parent=1 // pred_fallthru
      _
    // Predicated region
    $region34: #{tpu_custom_call.1} parent=1 // pred_check
      _
    $region35: #{tpu_custom_call.1} parent=1 // pred_check_branch
      %302 = sbr.rel (0) target = $region37
    $region36: #{tpu_custom_call.1} parent=1 // pred_region
      %s304 = ssub.s32 256, 256
      %305 = vsyncadd [#allocation4], %s304
      %s306 = sshll.u32 [#allocation3], 4
      %s307 = int_to_ptr.vmem [resolvable:$true] %s306
      %312 = dma.vmem_to_hbm [thread:$0]  %s307, 256, %s6, [#allocation4], 128, 128, 8
    $region37: #{tpu_custom_call.1} parent=1 // pred_fallthru
      _
    // Predicated region
    $region38: #{tpu_custom_call.1} parent=1 // pred_check
      _
    $region39: #{tpu_custom_call.1} parent=1 // pred_check_branch
      %314 = sbr.rel (0) target = $region41
    $region40: #{tpu_custom_call.1} parent=1 // pred_region
      %315 = dma.done [#allocation4], 256
    $region41: #{tpu_custom_call.1} parent=1 // pred_fallthru
      _
    %316 = vsyncpa [#allocation4], 1

</llo_original>
